<compile_context>
chip_gen: v6e
topology: v6e:2x2x1
jax: 0.10.0
libtpu: 0.0.40
codegen_flags: <defaults>
</compile_context>

<pallas_src>
import math
from functools import reduce
import operator

import jax
import jax.numpy as jnp
from jax.experimental import pallas as pl
from jax.experimental.pallas import tpu as pltpu


def _prod(xs):
    return reduce(operator.mul, xs, 1)


def _cdiv(a, b):
    return -(-a // b)


def _round_up(x, m):
    return _cdiv(x, m) * m


def _vmem_limit_bytes():
    # Generation-aware VMEM budget; leave headroom for compiler-internal scratch.
    # v7x: 64 MiB physical -> ~48 MiB; v5e/v6e: 128 MiB physical -> ~100 MiB.
    try:
        cap = pltpu.get_tpu_info().vmem_capacity_bytes
        return int(max(32 << 20, min(100 << 20, cap - (16 << 20))))
    except Exception:
        return 48 << 20


# ------------------------------ kernels ------------------------------------ #

def _linear_kernel_f32out(x_ref, w_ref, b_ref, o_ref):
    # x: (tm, tk), w: (tk, tn) [pre-transposed (K, M) layout], b: (1, tn) f32,
    # o: (tm, tn) f32 — VMEM-resident across the K axis, used as the accumulator.
    k = pl.program_id(2)

    @pl.when(k == 0)
    def _():
        o_ref[...] = jnp.zeros_like(o_ref)

    # Cast x to the (possibly bf16) weight dtype on the VPU; accumulate in f32.
    o_ref[...] += jnp.dot(
        x_ref[...].astype(w_ref.dtype), w_ref[...],
        preferred_element_type=jnp.float32,
    )

    @pl.when(k == pl.num_programs(2) - 1)
    def _():
        o_ref[...] += b_ref[...]


def _linear_kernel_scratch(x_ref, w_ref, b_ref, o_ref, acc_ref):
    # Generic-output-dtype path: f32 scratch accumulator, cast in the epilogue.
    k = pl.program_id(2)

    @pl.when(k == 0)
    def _():
        acc_ref[...] = jnp.zeros_like(acc_ref)

    acc_ref[...] += jnp.dot(
        x_ref[...].astype(w_ref.dtype), w_ref[...],
        preferred_element_type=jnp.float32,
    )

    @pl.when(k == pl.num_programs(2) - 1)
    def _():
        o_ref[...] = (acc_ref[...] + b_ref[...]).astype(o_ref.dtype)


# --------------------------- parameter preparation -------------------------- #

def prepare_linear_params(weight, bias, out_features, *,
                          tn_max=512, tk_max=1024, compute_dtype=None):
    """One-time (per-parameter) preparation: transpose, optional bf16 cast, pad.

    weight: (M, K) f32, K = prod(in_features), M = prod(out_features)
    bias:   (M,) f32 or None
    compute_dtype: e.g. jnp.bfloat16 for the native-MXU path on v6e/v7x.
    """
    M, K = weight.shape
    out_features = (out_features,) if isinstance(out_features, int) else tuple(out_features)
    assert _prod(out_features) == M

    # Tile picks that keep padding to at most one sub-tile.
    nj = _cdiv(M, tn_max)
    tn = _round_up(_cdiv(M, nj), 128)
    Mp = nj * tn
    nk = _cdiv(K, tk_max)
    tk = _round_up(_cdiv(K, nk), 128)
    Kp = nk * tk

    w = weight.T                                   # (K, M): one-time transpose
    if compute_dtype is not None:
        w = w.astype(compute_dtype)
    if (Kp, Mp) != (K, M):
        w = jnp.pad(w, ((0, Kp - K), (0, Mp - M)))  # zero-pad: keeps reduction exact

    if bias is None:
        b = jnp.zeros((1, Mp), jnp.float32)
    else:
        b = bias.astype(jnp.float32).reshape(1, M)
        if Mp != M:
            b = jnp.pad(b, ((0, 0), (0, Mp - M)))

    return {
        "w": w, "b": b,
        "K": K, "M": M, "Kp": Kp, "Mp": Mp,
        "tn": tn, "tk": tk,
        "out_features": out_features,
    }


# ------------------------------ forward ------------------------------------ #

def linear_forward(x, params, *, tm_max=512):
    """Pallas equivalent of Linear.forward (identity constraint_func).

    x: (B, *in_features); returns (B, *out_features) in x.dtype.
    """
    B = x.shape[0]
    K, M = params["K"], params["M"]
    Kp, Mp = params["Kp"], params["Mp"]
    tn, tk = params["tn"], params["tk"]
    w, b = params["w"], params["b"]
    out_features = params["out_features"]
    assert _prod(x.shape[1:]) == K

    # Batch tile: at most one sub-tile of padding.
    ni = _cdiv(B, tm_max)
    tm = _round_up(_cdiv(B, ni), 8)
    nj = Mp // tn
    # Keep both TensorCores busy (v7x) when the parallel grid would be 1x1.
    if ni * nj == 1 and B >= 16:
        ni = 2
        tm = _round_up(_cdiv(B, ni), 8)
    Bp = ni * tm
    nk = Kp // tk
    grid = (ni, nj, nk)

    x2d = x.reshape(B, K)                       # flatten(start_dim=1)
    if (Bp, Kp) != (B, K):
        x2d = jnp.pad(x2d, ((0, Bp - B), (0, Kp - K)))

    x_bytes = jnp.dtype(x.dtype).itemsize
    w_bytes = jnp.dtype(w.dtype).itemsize
    cost = pl.CostEstimate(
        flops=2 * B * K * M,
        transcendentals=0,
        bytes_accessed=int(x_bytes * B * K * nj + w_bytes * M * K * ni
                           + x_bytes * B * M + 4 * M),
    )
    cparams = pltpu.CompilerParams(
        dimension_semantics=("parallel", "parallel", "arbitrary"),
        vmem_limit_bytes=_vmem_limit_bytes(),
    )

    in_specs = [
        pl.BlockSpec((tm, tk), lambda i, j, k: (i, k)),
        pl.BlockSpec((tk, tn), lambda i, j, k: (k, j)),
        pl.BlockSpec((1, tn), lambda i, j, k: (0, j)),
    ]
    out_spec = pl.BlockSpec((tm, tn), lambda i, j, k: (i, j))

    if jnp.dtype(x.dtype) == jnp.dtype(jnp.float32):
        kernel = _linear_kernel_f32out
        scratch = []
    else:
        kernel = _linear_kernel_scratch
        scratch = [pltpu.VMEM((tm, tn), jnp.float32)]

    y = pl.pallas_call(
        kernel,
        out_shape=jax.ShapeDtypeStruct((Bp, Mp), x.dtype),
        grid_spec=pltpu.PrefetchScalarGridSpec(
            num_scalar_prefetch=0,
            grid=grid,
            in_specs=in_specs,
            out_specs=out_spec,
            scratch_shapes=scratch,
        ),
        compiler_params=cparams,
        cost_estimate=cost,
    )(x2d, w, b)

    if (Bp, Mp) != (B, M):
        y = y[:B, :M]
    return y.reshape((B,) + out_features)


# ------------------------------ init --------------------------------------- #

def init_linear_params(key, in_features, out_features, bias=True):
    """Deterministic init mimicking Linear.reset_parameters
    (kaiming_uniform_ default: a=0, fan_in mode, gain=sqrt(2))."""
    in_features = (in_features,) if isinstance(in_features, int) else tuple(in_features)
    out_features = (out_features,) if isinstance(out_features, int) else tuple(out_features)
    K = _prod(in_features)
    M = _prod(out_features)

    kw, kb = jax.random.split(key)
    gain = math.sqrt(2.0)
    w_bound = gain * math.sqrt(3.0 / K)
    W = jax.random.uniform(kw, (M, K), jnp.float32, minval=-w_bound, maxval=w_bound)

    b = None
    if bias:
        b_bound = 1.0 / math.sqrt(K) if K > 0 else 0.0
        b = jax.random.uniform(kb, (M,), jnp.float32, minval=-b_bound, maxval=b_bound)

    return W, b, in_features, out_features


# ------------------------------ demo / check -------------------------------- #

if __name__ == "__main__":
    key = jax.random.PRNGKey(0)

    # Case 1: small multi-dim in/out spaces (module semantics), f32 path.
    k1, k2, key = jax.random.split(key, 3)
    W, b, in_feat, out_feat = init_linear_params(k1, (4, 8), (2, 8), bias=True)
    x = jax.random.normal(k2, (2,) + in_feat, jnp.float32)
    p = prepare_linear_params(W, b, out_feat)
    y = jax.block_until_ready(linear_forward(x, p))
    y_ref = (x.reshape(2, -1) @ W.T + b).reshape((2,) + out_feat)
    assert y.shape == (2,) + out_feat
    assert jnp.allclose(y, y_ref, atol=1e-5, rtol=1e-5)

    # Case 2: full (B, M, K) tiled grid + K accumulation + M/K padding.
    k3, k4, key = jax.random.split(key, 3)
    W2, b2, in_feat2, out_feat2 = init_linear_params(k3, (8, 40), (192,), bias=True)
    x2 = jax.random.normal(k4, (16,) + in_feat2, jnp.float32)
    p2 = prepare_linear_params(W2, b2, out_feat2, tn_max=128, tk_max=128)
    y2 = jax.block_until_ready(linear_forward(x2, p2, tm_max=8))
    y2_ref = (x2.reshape(16, -1) @ W2.T + b2).reshape((16,) + out_feat2)
    assert y2.shape == (16,) + out_feat2
    assert jnp.allclose(y2, y2_ref, atol=1e-4, rtol=1e-4)

    # Case 3: bias=None path + batch-split heuristic (1x1 parallel grid avoided).
    k5, k6, key = jax.random.split(key, 3)
    W3, b3, in_feat3, out_feat3 = init_linear_params(k5, (16,), (24,), bias=False)
    x3 = jax.random.normal(k6, (16,) + in_feat3, jnp.float32)
    p3 = prepare_linear_params(W3, b3, out_feat3)
    y3 = jax.block_until_ready(linear_forward(x3, p3))
    y3_ref = (x3.reshape(16, -1) @ W3.T).reshape((16,) + out_feat3)
    assert jnp.allclose(y3, y3_ref, atol=1e-5, rtol=1e-5)

    # Case 4: bf16 compute path (native MXU dtype on v6e/v7x), f32 accumulation.
    p2_bf16 = prepare_linear_params(W2, b2, out_feat2, tn_max=128, tk_max=128,
                                    compute_dtype=jnp.bfloat16)
    y2b = jax.block_until_ready(linear_forward(x2, p2_bf16, tm_max=8))
    assert jnp.allclose(y2b, y2_ref, atol=5e-2, rtol=5e-2)

    print("KERNEL_OK")
</pallas_src>

<mosaic_0001>
module attributes {stable_mosaic.version = 11 : i64} {
  func.func @_linear_kernel_f32out(%arg0: i32, %arg1: i32, %arg2: i32, %arg3: memref<8x128xf32, #tpu.memory_space<vmem>>, %arg4: memref<128x128xf32, #tpu.memory_space<vmem>>, %arg5: memref<1x128xf32, #tpu.memory_space<vmem>>, %arg6: memref<8x128xf32, #tpu.memory_space<vmem>>) attributes {dimension_semantics = [#tpu.dimension_semantics<parallel>, #tpu.dimension_semantics<parallel>, #tpu.dimension_semantics<arbitrary>], iteration_bounds = array<i64: 1, 1, 1>, scalar_prefetch = 0 : i64, scratch_operands = 0 : i64, tpu.core_type = #tpu.core_type<tc>, window_params = [{transform_indices = @transform_0, window_bounds = array<i64: 8, 128>}, {transform_indices = @transform_1, window_bounds = array<i64: 128, 128>}, {transform_indices = @transform_2, window_bounds = array<i64: 1, 128>}, {transform_indices = @transform_3, window_bounds = array<i64: 8, 128>}]} {
    %c0_i32 = arith.constant 0 : i32
    %0 = arith.cmpi eq, %arg2, %c0_i32 : i32
    %1 = arith.extui %0 : i1 to i32
    %c0_i32_0 = arith.constant 0 : i32
    %2 = arith.cmpi ne, %1, %c0_i32_0 : i32
    scf.if %2 {
      %cst_10 = arith.constant 0.000000e+00 : f32
      %12 = vector.broadcast %cst_10 : f32 to vector<8x128xf32>
      %c0_11 = arith.constant 0 : index
      %c0_12 = arith.constant 0 : index
      %13 = vector.load %arg6[%c0_11, %c0_12] : memref<8x128xf32, #tpu.memory_space<vmem>>, vector<8x128xf32>
      tpu.vector_store %arg6[%c0_11, %c0_12], %12 {strides = array<i32>} : memref<8x128xf32, #tpu.memory_space<vmem>>, vector<8x128xf32>,
    } else {
    }
    %c0 = arith.constant 0 : index
    %c0_1 = arith.constant 0 : index
    %3 = vector.load %arg6[%c0, %c0_1] : memref<8x128xf32, #tpu.memory_space<vmem>>, vector<8x128xf32>
    %c0_2 = arith.constant 0 : index
    %c0_3 = arith.constant 0 : index
    %4 = vector.load %arg3[%c0_2, %c0_3] : memref<8x128xf32, #tpu.memory_space<vmem>>, vector<8x128xf32>
    %c0_4 = arith.constant 0 : index
    %c0_5 = arith.constant 0 : index
    %5 = vector.load %arg4[%c0_4, %c0_5] : memref<128x128xf32, #tpu.memory_space<vmem>>, vector<128x128xf32>
    %cst = arith.constant dense<0.000000e+00> : vector<8x128xf32>
    %6 = tpu.matmul %4, %5, %cst {dimension_numbers = #tpu.dot_dimension_numbers<[1], [0], [0], [1], [0, 0, 1, 1], [], []>} : vector<8x128xf32>, vector<128x128xf32>, vector<8x128xf32> -> vector<8x128xf32>
    %7 = arith.addf %3, %6 : vector<8x128xf32>
    %c0_6 = arith.constant 0 : index
    %c0_7 = arith.constant 0 : index
    %8 = vector.load %arg6[%c0_6, %c0_7] : memref<8x128xf32, #tpu.memory_space<vmem>>, vector<8x128xf32>
    tpu.vector_store %arg6[%c0_6, %c0_7], %7 {strides = array<i32>} : memref<8x128xf32, #tpu.memory_space<vmem>>, vector<8x128xf32>,
    %c0_i32_8 = arith.constant 0 : i32
    %9 = arith.cmpi eq, %arg2, %c0_i32_8 : i32
    %10 = arith.extui %9 : i1 to i32
    %c0_i32_9 = arith.constant 0 : i32
    %11 = arith.cmpi ne, %10, %c0_i32_9 : i32
    scf.if %11 {
      %c0_10 = arith.constant 0 : index
      %c0_11 = arith.constant 0 : index
      %12 = vector.load %arg6[%c0_10, %c0_11] : memref<8x128xf32, #tpu.memory_space<vmem>>, vector<8x128xf32>
      %c0_12 = arith.constant 0 : index
      %c0_13 = arith.constant 0 : index
      %13 = vector.load %arg5[%c0_12, %c0_13] : memref<1x128xf32, #tpu.memory_space<vmem>>, vector<1x128xf32>
      %14 = vector.broadcast %13 : vector<1x128xf32> to vector<8x128xf32>
      %15 = arith.addf %12, %14 : vector<8x128xf32>
      %c0_14 = arith.constant 0 : index
      %c0_15 = arith.constant 0 : index
      %16 = vector.load %arg6[%c0_14, %c0_15] : memref<8x128xf32, #tpu.memory_space<vmem>>, vector<8x128xf32>
      tpu.vector_store %arg6[%c0_14, %c0_15], %15 {strides = array<i32>} : memref<8x128xf32, #tpu.memory_space<vmem>>, vector<8x128xf32>,
    } else {
    }
    return
  }
  func.func @transform_0(%arg0: i32, %arg1: i32, %arg2: i32) -> (i32, i32) {
    %c0_i32 = arith.constant 0 : i32
    return %arg0, %arg2 : i32, i32
  }
  func.func @transform_1(%arg0: i32, %arg1: i32, %arg2: i32) -> (i32, i32) {
    %c0_i32 = arith.constant 0 : i32
    return %arg2, %arg1 : i32, i32
  }
  func.func @transform_2(%arg0: i32, %arg1: i32, %arg2: i32) -> (i32, i32) {
    %c0_i32 = arith.constant 0 : i32
    %c0_i32_0 = arith.constant 0 : i32
    return %c0_i32, %arg1 : i32, i32
  }
  func.func @transform_3(%arg0: i32, %arg1: i32, %arg2: i32) -> (i32, i32) {
    %c0_i32 = arith.constant 0 : i32
    return %arg0, %arg1 : i32, i32
  }
}

</mosaic_0001>

<llo_original>
// kernel: tpu_custom_call.1
$region0: #{tpu_custom_call.1}
  #allocation0 [shape = 'u32[]', space=smem, size = 0x4, offset = 0x4, fixed_abs, tag = 'smem constant byte address 0x4 - core index']
  #allocation1 [shape = 'u32[144,128]{1,0:T(1,128)}', space=vmem, size = 0x12000, scoped, tag = 'internal scratch']
  %s0 = inlined_call_operand.hbm [shape: f32[8,128], index: 0, kind: input, shape index: {}]
  %s1 = inlined_call_operand.hbm [shape: f32[128,128], index: 1, kind: input, shape index: {}]
  %s2 = inlined_call_operand.vmem [shape: f32[1,128], index: 2, kind: input, shape index: {}]
  %s3 = inlined_call_operand.hbm [shape: f32[8,128], index: 3, kind: output, shape index: {}]
  %s4 = sld [smem:[#allocation0]]
  $region38: #{tpu_custom_call.1} parent=0
    _
  %s6 = ssub.s32 1, %s4
  %s7 = scalar_select 0, %s6, %s4
  $region1: #{tpu_custom_call.1} parent=0
    #allocation2 [shape = 'u8[4096]{0}', space=vmem, size = 0x1000, scoped, tag = 'input window, operand 0, single buffered']
    #allocation3 [shape = 's32[1]{0}', space=sflag, size = 0x4, scoped, tag = 'scoped memory for tpu_custom_call.1']
    #allocation4 [shape = 's32[1]{0}', space=sflag, size = 0x4, scoped, tag = 'scoped memory for tpu_custom_call.1']
    #allocation5 [shape = 'u8[65536]{0}', space=vmem, size = 0x10000, scoped, tag = 'input window, operand 1, single buffered']
    #allocation6 [shape = 's32[1]{0}', space=sflag, size = 0x4, scoped, tag = 'scoped memory for tpu_custom_call.1']
    #allocation7 [shape = 'u8[4096]{0}', space=vmem, size = 0x1000, scoped, tag = 'output window, operand 0, single buffered']
    %8 = vsyncpa [#allocation3], 0
    %9 = vsyncpa [#allocation6], 0
    %10 = vsyncpa [#allocation4], 0
    // Predicated region
    $region2: #{tpu_custom_call.1} parent=1 // pred_check
      _
    $region3: #{tpu_custom_call.1} parent=1 // pred_check_branch
      %12 = sbr.rel (0) target = $region5
    $region4: #{tpu_custom_call.1} parent=1 // pred_region
      %s14 = ssub.s32 128, 128
      %15 = vsyncadd [#allocation3], %s14
      %s17 = sshll.u32 [#allocation2], 4
      %s18 = int_to_ptr.vmem [resolvable:$true] %s17
      %20 = dma.hbm_to_vmem [thread:$0]  %s0, 128, %s18, [#allocation3]
    $region5: #{tpu_custom_call.1} parent=1 // pred_fallthru
      _
    // Predicated region
    $region6: #{tpu_custom_call.1} parent=1 // pred_check
      _
    $region7: #{tpu_custom_call.1} parent=1 // pred_check_branch
      %22 = sbr.rel (0) target = $region9
    $region8: #{tpu_custom_call.1} parent=1 // pred_region
      %s24 = ssub.s32 2048, 2048
      %25 = vsyncadd [#allocation6], %s24
      %s26 = sshll.u32 [#allocation5], 4
      %s27 = int_to_ptr.vmem [resolvable:$true] %s26
      %32 = dma.hbm_to_vmem [thread:$0]  %s1, 2048, %s27, [#allocation6], 128, 128, 8
    $region9: #{tpu_custom_call.1} parent=1 // pred_fallthru
      _
    // Predicated region
    $region10: #{tpu_custom_call.1} parent=1 // pred_check
      _
    $region11: #{tpu_custom_call.1} parent=1 // pred_check_branch
      %34 = sbr.rel (0) target = $region13
    $region12: #{tpu_custom_call.1} parent=1 // pred_region
      _
    $region13: #{tpu_custom_call.1} parent=1 // pred_fallthru
      _
    // Predicated region
    $region14: #{tpu_custom_call.1} parent=1 // pred_check
      _
    $region15: #{tpu_custom_call.1} parent=1 // pred_check_branch
      %36 = sbr.rel (0) target = $region17
    $region16: #{tpu_custom_call.1} parent=1 // pred_region
      %37 = dma.done [#allocation3], 128
    $region17: #{tpu_custom_call.1} parent=1 // pred_fallthru
      _
    // Predicated region
    $region18: #{tpu_custom_call.1} parent=1 // pred_check
      _
    $region19: #{tpu_custom_call.1} parent=1 // pred_check_branch
      %39 = sbr.rel (0) target = $region21
    $region20: #{tpu_custom_call.1} parent=1 // pred_region
      %40 = dma.done [#allocation6], 2048
    $region21: #{tpu_custom_call.1} parent=1 // pred_fallthru
      _
    %p41 = scmp.eq.s32.totalorder 0, 0
    // Predicated region
    $region22: #{tpu_custom_call.1} parent=1 // pred_check
      %p42 = pneg %p41
    $region23: #{tpu_custom_call.1} parent=1 // pred_check_branch
      %44 = sbr.rel (%p42) target = $region25
    $region24: #{tpu_custom_call.1} parent=1 // pred_region
      %45 = vst [vmem:[#allocation7] sm:$0xff] 0.0
    $region25: #{tpu_custom_call.1} parent=1 // pred_fallthru
      _
    %v46 = vld [vmem:[#allocation7] sm:$0xff]
    %v47 = vld [vmem:[#allocation2] sm:$0xff]
    %v48 = vld [vmem:[#allocation5] sm:$0xff]
    %v49 = vld [vmem:[#allocation5 + $0x8] sm:$0xff]
    %v50 = vld [vmem:[#allocation5 + $0x10] sm:$0xff]
    %v51 = vld [vmem:[#allocation5 + $0x18] sm:$0xff]
    %v52 = vld [vmem:[#allocation5 + $0x20] sm:$0xff]
    %v53 = vld [vmem:[#allocation5 + $0x28] sm:$0xff]
    %v54 = vld [vmem:[#allocation5 + $0x30] sm:$0xff]
    %v55 = vld [vmem:[#allocation5 + $0x38] sm:$0xff]
    %v56 = vld [vmem:[#allocation5 + $0x40] sm:$0xff]
    %v57 = vld [vmem:[#allocation5 + $0x48] sm:$0xff]
    %v58 = vld [vmem:[#allocation5 + $0x50] sm:$0xff]
    %v59 = vld [vmem:[#allocation5 + $0x58] sm:$0xff]
    %v60 = vld [vmem:[#allocation5 + $0x60] sm:$0xff]
    %v61 = vld [vmem:[#allocation5 + $0x68] sm:$0xff]
    %v62 = vld [vmem:[#allocation5 + $0x70] sm:$0xff]
    %v63 = vld [vmem:[#allocation5 + $0x78] sm:$0xff]
    %64 = vmatprep.subr.mxu0 0.0
    %65 = vmatpush1.msra.mxu0 %v63
    %66 = vmatprep.subr.mxu0 0.0
    %67 = vmatpush1.msra.mxu0 %v62
    %68 = vmatprep.subr.mxu0 0.0
    %69 = vmatpush1.msra.mxu0 %v61
    %70 = vmatprep.subr.mxu0 0.0
    %71 = vmatpush1.msra.mxu0 %v60
    %72 = vmatprep.subr.mxu0 0.0
    %73 = vmatpush1.msra.mxu0 %v59
    %74 = vmatprep.subr.mxu0 0.0
    %75 = vmatpush1.msra.mxu0 %v58
    %76 = vmatprep.subr.mxu0 0.0
    %77 = vmatpush1.msra.mxu0 %v57
    %78 = vmatprep.subr.mxu0 0.0
    %79 = vmatpush1.msra.mxu0 %v56
    %80 = vmatprep.subr.mxu0 0.0
    %81 = vmatpush1.msra.mxu0 %v55
    %82 = vmatprep.subr.mxu0 0.0
    %83 = vmatpush1.msra.mxu0 %v54
    %84 = vmatprep.subr.mxu0 0.0
    %85 = vmatpush1.msra.mxu0 %v53
    %86 = vmatprep.subr.mxu0 0.0
    %87 = vmatpush1.msra.mxu0 %v52
    %88 = vmatprep.subr.mxu0 0.0
    %89 = vmatpush1.msra.mxu0 %v51
    %90 = vmatprep.subr.mxu0 0.0
    %91 = vmatpush1.msra.mxu0 %v50
    %92 = vmatprep.subr.mxu0 0.0
    %93 = vmatpush1.msra.mxu0 %v49
    %94 = vmatprep.subr.mxu0 0.0
    %95 = vmatpush1.msra.mxu0 %v48
    %96 = vmatprep.subr.mxu0 0.0
    %97 = vmatpush2.msra.mxu0 0.0
    %98 = vmatprep.subr.mxu0 0.0
    %99 = vmatpush2.msra.mxu0 0.0
    %100 = vmatprep.subr.mxu0 0.0
    %101 = vmatpush2.msra.mxu0 0.0
    %102 = vmatprep.subr.mxu0 0.0
    %103 = vmatpush2.msra.mxu0 0.0
    %104 = vmatprep.subr.mxu0 0.0
    %105 = vmatpush2.msra.mxu0 0.0
    %106 = vmatprep.subr.mxu0 0.0
    %107 = vmatpush2.msra.mxu0 0.0
    %108 = vmatprep.subr.mxu0 0.0
    %109 = vmatpush2.msra.mxu0 0.0
    %110 = vmatprep.subr.mxu0 0.0
    %111 = vmatpush2.msra.mxu0 0.0
    %112 = vmatprep.subr.mxu0 0.0
    %113 = vmatpush2.msra.mxu0 0.0
    %114 = vmatprep.subr.mxu0 0.0
    %115 = vmatpush2.msra.mxu0 0.0
    %116 = vmatprep.subr.mxu0 0.0
    %117 = vmatpush2.msra.mxu0 0.0
    %118 = vmatprep.subr.mxu0 0.0
    %119 = vmatpush2.msra.mxu0 0.0
    %120 = vmatprep.subr.mxu0 0.0
    %121 = vmatpush2.msra.mxu0 0.0
    %122 = vmatprep.subr.mxu0 0.0
    %123 = vmatpush2.msra.mxu0 0.0
    %124 = vmatprep.subr.mxu0 0.0
    %125 = vmatpush2.msra.mxu0 0.0
    %126 = vmatprep.subr.mxu0 0.0
    %127 = vmatpush2.msra.mxu0 0.0
    %128 = vmatprep.mubr.f32.mxu0 0.0
    %129 = vmatmul.mubr.f32.gmra.mxu0 %v47
    %v130 = vpop.f32.mrf.mxu0
    %v131 = vadd.f32 0.0, %v130
    %v132 = vpop.f32.mrf.mxu0
    %133 = vdwg.mxu0
    %v134 = vadd.f32 %v46, %v131
    %135 = vst [vmem:[#allocation7] sm:$0xff] %v134
    // Predicated region
    $region26: #{tpu_custom_call.1} parent=1 // pred_check
      %p136 = pneg %p41
    $region27: #{tpu_custom_call.1} parent=1 // pred_check_branch
      %138 = sbr.rel (%p136) target = $region29
    $region28: #{tpu_custom_call.1} parent=1 // pred_region
      %v139 = vld [vmem:[#allocation7] sm:$0xff]
      %v140 = vld [vmem:[%s2] sm:$0x1]
      %v142 = vlaneseq
      %v143 = vshrl.u32 %v142, 7
      %v144 = vsub.s32 0, %v143
      %v145 = vrot.slane %v140, %v144
      %v147 = vadd.f32 %v139, %v145
      %148 = vst [vmem:[#allocation7] sm:$0xff] %v147
    $region29: #{tpu_custom_call.1} parent=1 // pred_fallthru
      _
    // Predicated region
    $region30: #{tpu_custom_call.1} parent=1 // pred_check
      _
    $region31: #{tpu_custom_call.1} parent=1 // pred_check_branch
      %150 = sbr.rel (0) target = $region33
    $region32: #{tpu_custom_call.1} parent=1 // pred_region
      %s152 = ssub.s32 128, 128
      %153 = vsyncadd [#allocation4], %s152
      %s155 = sshll.u32 [#allocation7], 4
      %s156 = int_to_ptr.vmem [resolvable:$true] %s155
      %158 = dma.vmem_to_hbm [thread:$0]  %s156, 128, %s3, [#allocation4]
    $region33: #{tpu_custom_call.1} parent=1 // pred_fallthru
      _
    // Predicated region
    $region34: #{tpu_custom_call.1} parent=1 // pred_check
      _
    $region35: #{tpu_custom_call.1} parent=1 // pred_check_branch
      %160 = sbr.rel (0) target = $region37
    $region36: #{tpu_custom_call.1} parent=1 // pred_region
      %161 = dma.done [#allocation4], 128
    $region37: #{tpu_custom_call.1} parent=1 // pred_fallthru
      _
    %162 = vsyncpa [#allocation3], 1
    %163 = vsyncpa [#allocation6], 1
    %164 = vsyncpa [#allocation4], 1

</llo_original>
